<compile_context>
chip_gen: v6e
topology: v6e:2x2x1
jax: 0.10.0
libtpu: 0.0.40
codegen_flags: <defaults>
</compile_context>

<pallas_src>
import functools
import math

import jax
import jax.numpy as jnp
from jax.experimental import pallas as pl
from jax.experimental.pallas import tpu as pltpu

X_MIN = -3.0
X_MAX = 3.0


def _round_up(n, m):
    return ((n + m - 1) // m) * m


# ----------------------------- Pallas kernel --------------------------------
def _spreecher_kernel(x_ref, qa_ref, alfa_ref, coef_ref, y_ref, *, x_min, step):
    inv_step = 1.0 / step
    xs = (x_ref[...] - x_min) * inv_step          # (TB, I)  pre-normalised x
    qas = qa_ref[...] * inv_step                  # (1, TO)  pre-normalised qa
    alfa = alfa_ref[...]                          # (I, TO)
    coef = coef_ref[...]                          # (I, G)
    G = coef.shape[1]

    # t[b, i, o] = clip((x[b, i] + qa[o] - x_min) / step, 0, G-1)
    # (clamp -> constant extrapolation of the linear spline)
    t = jnp.clip(xs[:, :, None] + qas[None], 0.0, float(G - 1))   # (TB, I, TO)

    # Per-knot weights with alfa pre-folded; hoisted out of the g-loop (small).
    w = [alfa * coef[:, g:g + 1] for g in range(G)]               # each (I, TO)

    acc = jnp.zeros(y_ref.shape, jnp.float32)                     # (TB, TO)
    for g in range(G):                            # G small & static -> unrolled
        basis = jnp.maximum(0.0, 1.0 - jnp.abs(t - float(g)))     # (TB, I, TO)
        acc = acc + jnp.sum(w[g][None, :, :] * basis, axis=1)     # reduce over I
    y_ref[...] = acc


def spreecher_forward(x, qa, alfa, coef, x_min=X_MIN, x_max=X_MAX,
                      tile_b=128, tile_o=256):
    B, I = x.shape
    O = qa.shape[0]
    G = coef.shape[1]
    assert G >= 2, "grid_size must be >= 2"
    step = (x_max - x_min) / (G - 1)

    # Lane-dense output: pad O to a multiple of 128; pad B to a multiple of 8.
    O_pad = _round_up(O, 128)
    B_pad = _round_up(B, 8)
    TILE_O = min(_round_up(tile_o, 128), O_pad)
    TILE_B = min(_round_up(tile_b, 8), B_pad)
    O_pad = _round_up(O_pad, TILE_O)
    B_pad = _round_up(B_pad, TILE_B)

    x_p = jnp.pad(x.astype(jnp.float32), ((0, B_pad - B), (0, 0)))
    qa_p = jnp.pad(qa.astype(jnp.float32).reshape(1, O), ((0, 0), (0, O_pad - O)))
    alfa_p = jnp.pad(alfa.astype(jnp.float32), ((0, 0), (0, O_pad - O)))
    coef_p = coef.astype(jnp.float32)

    grid = (B_pad // TILE_B, O_pad // TILE_O)

    # VMEM budget: double-buffered in/out blocks + (TB, I, TO) f32 temporaries;
    # clamp to [32 MiB, 64 MiB] (v7x has 64 MiB per TensorCore).
    f32b = 4
    interm = TILE_B * I * TILE_O * f32b * 3
    bufs = 2 * f32b * (TILE_B * I + TILE_O + I * TILE_O + I * G + TILE_B * TILE_O)
    vmem_limit = int(min(max(2 * (interm + bufs), 32 << 20), 64 << 20))

    kernel = functools.partial(_spreecher_kernel, x_min=float(x_min), step=float(step))
    y_pad = pl.pallas_call(
        kernel,
        out_shape=jax.ShapeDtypeStruct((B_pad, O_pad), jnp.float32),
        grid=grid,
        in_specs=[
            pl.BlockSpec((TILE_B, I), lambda bi, oi: (bi, 0)),
            pl.BlockSpec((1, TILE_O), lambda bi, oi: (0, oi)),
            pl.BlockSpec((I, TILE_O), lambda bi, oi: (0, oi)),
            pl.BlockSpec((I, G), lambda bi, oi: (0, 0)),
        ],
        out_specs=pl.BlockSpec((TILE_B, TILE_O), lambda bi, oi: (bi, oi)),
        compiler_params=pltpu.CompilerParams(
            dimension_semantics=("parallel", "parallel"),
            vmem_limit_bytes=vmem_limit,
        ),
    )(x_p, qa_p, alfa_p, coef_p)
    return y_pad[:B, :O]


# -------------------------- parameter construction --------------------------
def make_spreecher_params(input_size, output_size, base=10, r_max=10, grid_size=5, key=None):
    if grid_size % 2 == 0:
        grid_size += 1

    # aux[0] = 1 ; aux[p-1] = sum_{r=1}^{r_max-1} base^{-(p-1)(I^r - 1)/(I - 1)}
    aux = [1.0]
    for p in range(2, input_size + 1):
        acc = 0.0
        for r in range(1, r_max):
            expo = -(p - 1) * (input_size ** r - 1) / (input_size - 1)
            acc += math.pow(float(base), expo)  # underflows to 0.0 for huge |expo|
        aux.append(acc)
    aux = jnp.asarray(aux, jnp.float32)                                      # (I,)

    # alfa in the torch module ends up (1, I, O) with alfa[0, i, o] = aux[i]
    alfa = jnp.broadcast_to(aux[:, None], (input_size, output_size))         # (I, O)

    a = 1.0 / (base * (base - 1))
    qa = a * jnp.arange(output_size, dtype=jnp.float32)                      # (O,)

    # Deterministic B-spline coefficients: near-identity per channel.
    knots = jnp.linspace(X_MIN, X_MAX, grid_size, dtype=jnp.float32)         # (G,)
    pert = 0.05 * jax.random.normal(key, (input_size, grid_size), jnp.float32)
    coef = jnp.broadcast_to(knots[None, :], (input_size, grid_size)) + pert  # (I, G)

    return alfa, qa, coef, grid_size


# ------------------------------ pure-JAX ref ---------------------------------
def spreecher_ref(x, qa, alfa, coef, x_min=X_MIN, x_max=X_MAX):
    G = coef.shape[1]
    step = (x_max - x_min) / (G - 1)
    z = x[:, :, None] + qa[None, None, :]
    t = jnp.clip((z - x_min) / step, 0.0, float(G - 1))
    s = jnp.zeros_like(z)
    for g in range(G):
        s = s + coef[:, g][None, :, None] * jnp.maximum(0.0, 1.0 - jnp.abs(t - float(g)))
    return jnp.sum(alfa[None, :, :] * s, axis=1)


# ---------------------------------- main -------------------------------------
if __name__ == "__main__":
    batch, input_size, output_size, grid_size = 16, 8, 160, 5

    key = jax.random.PRNGKey(0)
    k_x, k_coef = jax.random.split(key)

    alfa, qa, coef, grid_size = make_spreecher_params(
        input_size, output_size, base=10, r_max=10, grid_size=grid_size, key=k_coef
    )
    x = jax.random.normal(k_x, (batch, input_size), jnp.float32)

    # Small tiles here to exercise a real 2x2 grid at toy shapes; defaults
    # (tile_b=128, tile_o=256) are the production sizes.
    y = spreecher_forward(x, qa, alfa, coef, tile_b=8, tile_o=128)
    y = jax.block_until_ready(y)

    y_ref = spreecher_ref(x, qa, alfa, coef)
    assert y.shape == (batch, output_size)
    assert jnp.allclose(y, y_ref, atol=1e-4, rtol=1e-5), "mismatch vs JAX reference"

    print("KERNEL_OK")
</pallas_src>

<mosaic_0001>
module attributes {stable_mosaic.version = 11 : i64} {
  func.func @_spreecher_kernel(%arg0: i32, %arg1: i32, %arg2: memref<8x8xf32, #tpu.memory_space<vmem>>, %arg3: memref<1x128xf32, #tpu.memory_space<vmem>>, %arg4: memref<8x128xf32, #tpu.memory_space<vmem>>, %arg5: memref<8x5xf32, #tpu.memory_space<vmem>>, %arg6: memref<8x128xf32, #tpu.memory_space<vmem>>) attributes {dimension_semantics = [#tpu.dimension_semantics<parallel>, #tpu.dimension_semantics<parallel>], iteration_bounds = array<i64: 2, 2>, scalar_prefetch = 0 : i64, scratch_operands = 0 : i64, tpu.core_type = #tpu.core_type<tc>, window_params = [{transform_indices = @transform_0, window_bounds = array<i64: 8, 8>}, {transform_indices = @transform_1, window_bounds = array<i64: 1, 128>}, {transform_indices = @transform_2, window_bounds = array<i64: 8, 128>}, {pipeline_mode = #tpu.pipeline_mode<synchronous>, transform_indices = @transform_3, window_bounds = array<i64: 8, 5>}, {transform_indices = @transform_4, window_bounds = array<i64: 8, 128>}]} {
    %c0 = arith.constant 0 : index
    %c0_0 = arith.constant 0 : index
    %0 = vector.load %arg2[%c0, %c0_0] : memref<8x8xf32, #tpu.memory_space<vmem>>, vector<8x8xf32>
    %cst = arith.constant -3.000000e+00 : f32
    %1 = vector.broadcast %cst : f32 to vector<8x8xf32>
    %2 = arith.subf %0, %1 : vector<8x8xf32>
    %cst_1 = arith.constant 0.666666686 : f32
    %3 = vector.broadcast %cst_1 : f32 to vector<8x8xf32>
    %4 = arith.mulf %2, %3 : vector<8x8xf32>
    %c0_2 = arith.constant 0 : index
    %c0_3 = arith.constant 0 : index
    %5 = vector.load %arg3[%c0_2, %c0_3] : memref<1x128xf32, #tpu.memory_space<vmem>>, vector<1x128xf32>
    %cst_4 = arith.constant 0.666666686 : f32
    %6 = vector.broadcast %cst_4 : f32 to vector<1x128xf32>
    %7 = arith.mulf %5, %6 : vector<1x128xf32>
    %c0_5 = arith.constant 0 : index
    %c0_6 = arith.constant 0 : index
    %8 = vector.load %arg4[%c0_5, %c0_6] : memref<8x128xf32, #tpu.memory_space<vmem>>, vector<8x128xf32>
    %c0_7 = arith.constant 0 : index
    %c0_8 = arith.constant 0 : index
    %9 = vector.load %arg5[%c0_7, %c0_8] : memref<8x5xf32, #tpu.memory_space<vmem>>, vector<8x5xf32>
    %10 = vector.shape_cast %4 : vector<8x8xf32> to vector<8x8x1xf32>
    %11 = vector.shape_cast %7 : vector<1x128xf32> to vector<1x1x128xf32>
    %12 = vector.broadcast %10 : vector<8x8x1xf32> to vector<8x8x128xf32>
    %13 = vector.broadcast %11 : vector<1x1x128xf32> to vector<8x8x128xf32>
    %14 = arith.addf %12, %13 : vector<8x8x128xf32>
    %cst_9 = arith.constant 0.000000e+00 : f32
    %cst_10 = arith.constant 4.000000e+00 : f32
    %15 = vector.broadcast %cst_9 : f32 to vector<8x8x128xf32>
    %16 = arith.maximumf %15, %14 : vector<8x8x128xf32>
    %17 = vector.broadcast %cst_10 : f32 to vector<8x8x128xf32>
    %18 = arith.minimumf %17, %16 : vector<8x8x128xf32>
    %19 = vector.extract_strided_slice %9 {offsets = [0, 0], sizes = [8, 1], strides = [1, 1]} : vector<8x5xf32> to vector<8x1xf32>
    %20 = vector.broadcast %19 : vector<8x1xf32> to vector<8x128xf32>
    %21 = arith.mulf %8, %20 : vector<8x128xf32>
    %22 = vector.extract_strided_slice %9 {offsets = [0, 1], sizes = [8, 1], strides = [1, 1]} : vector<8x5xf32> to vector<8x1xf32>
    %23 = vector.broadcast %22 : vector<8x1xf32> to vector<8x128xf32>
    %24 = arith.mulf %8, %23 : vector<8x128xf32>
    %25 = vector.extract_strided_slice %9 {offsets = [0, 2], sizes = [8, 1], strides = [1, 1]} : vector<8x5xf32> to vector<8x1xf32>
    %26 = vector.broadcast %25 : vector<8x1xf32> to vector<8x128xf32>
    %27 = arith.mulf %8, %26 : vector<8x128xf32>
    %28 = vector.extract_strided_slice %9 {offsets = [0, 3], sizes = [8, 1], strides = [1, 1]} : vector<8x5xf32> to vector<8x1xf32>
    %29 = vector.broadcast %28 : vector<8x1xf32> to vector<8x128xf32>
    %30 = arith.mulf %8, %29 : vector<8x128xf32>
    %31 = vector.extract_strided_slice %9 {offsets = [0, 4], sizes = [8, 1], strides = [1, 1]} : vector<8x5xf32> to vector<8x1xf32>
    %32 = vector.broadcast %31 : vector<8x1xf32> to vector<8x128xf32>
    %33 = arith.mulf %8, %32 : vector<8x128xf32>
    %cst_11 = arith.constant 0.000000e+00 : f32
    %34 = vector.broadcast %cst_11 : f32 to vector<8x128xf32>
    %cst_12 = arith.constant 0.000000e+00 : f32
    %35 = vector.broadcast %cst_12 : f32 to vector<8x8x128xf32>
    %36 = arith.subf %18, %35 : vector<8x8x128xf32>
    %37 = math.absf %36 : vector<8x8x128xf32>
    %cst_13 = arith.constant 1.000000e+00 : f32
    %38 = vector.broadcast %cst_13 : f32 to vector<8x8x128xf32>
    %39 = arith.subf %38, %37 : vector<8x8x128xf32>
    %cst_14 = arith.constant 0.000000e+00 : f32
    %40 = vector.broadcast %cst_14 : f32 to vector<8x8x128xf32>
    %41 = arith.maximumf %40, %39 : vector<8x8x128xf32>
    %42 = vector.shape_cast %21 : vector<8x128xf32> to vector<1x8x128xf32>
    %43 = vector.broadcast %42 : vector<1x8x128xf32> to vector<8x8x128xf32>
    %44 = arith.mulf %43, %41 : vector<8x8x128xf32>
    %cst_15 = arith.constant dense<0.000000e+00> : vector<8x128xf32>
    %45 = vector.multi_reduction <add>, %44, %cst_15 [1] : vector<8x8x128xf32> to vector<8x128xf32>
    %46 = arith.addf %34, %45 : vector<8x128xf32>
    %cst_16 = arith.constant 1.000000e+00 : f32
    %47 = vector.broadcast %cst_16 : f32 to vector<8x8x128xf32>
    %48 = arith.subf %18, %47 : vector<8x8x128xf32>
    %49 = math.absf %48 : vector<8x8x128xf32>
    %cst_17 = arith.constant 1.000000e+00 : f32
    %50 = vector.broadcast %cst_17 : f32 to vector<8x8x128xf32>
    %51 = arith.subf %50, %49 : vector<8x8x128xf32>
    %cst_18 = arith.constant 0.000000e+00 : f32
    %52 = vector.broadcast %cst_18 : f32 to vector<8x8x128xf32>
    %53 = arith.maximumf %52, %51 : vector<8x8x128xf32>
    %54 = vector.shape_cast %24 : vector<8x128xf32> to vector<1x8x128xf32>
    %55 = vector.broadcast %54 : vector<1x8x128xf32> to vector<8x8x128xf32>
    %56 = arith.mulf %55, %53 : vector<8x8x128xf32>
    %cst_19 = arith.constant dense<0.000000e+00> : vector<8x128xf32>
    %57 = vector.multi_reduction <add>, %56, %cst_19 [1] : vector<8x8x128xf32> to vector<8x128xf32>
    %58 = arith.addf %46, %57 : vector<8x128xf32>
    %cst_20 = arith.constant 2.000000e+00 : f32
    %59 = vector.broadcast %cst_20 : f32 to vector<8x8x128xf32>
    %60 = arith.subf %18, %59 : vector<8x8x128xf32>
    %61 = math.absf %60 : vector<8x8x128xf32>
    %cst_21 = arith.constant 1.000000e+00 : f32
    %62 = vector.broadcast %cst_21 : f32 to vector<8x8x128xf32>
    %63 = arith.subf %62, %61 : vector<8x8x128xf32>
    %cst_22 = arith.constant 0.000000e+00 : f32
    %64 = vector.broadcast %cst_22 : f32 to vector<8x8x128xf32>
    %65 = arith.maximumf %64, %63 : vector<8x8x128xf32>
    %66 = vector.shape_cast %27 : vector<8x128xf32> to vector<1x8x128xf32>
    %67 = vector.broadcast %66 : vector<1x8x128xf32> to vector<8x8x128xf32>
    %68 = arith.mulf %67, %65 : vector<8x8x128xf32>
    %cst_23 = arith.constant dense<0.000000e+00> : vector<8x128xf32>
    %69 = vector.multi_reduction <add>, %68, %cst_23 [1] : vector<8x8x128xf32> to vector<8x128xf32>
    %70 = arith.addf %58, %69 : vector<8x128xf32>
    %cst_24 = arith.constant 3.000000e+00 : f32
    %71 = vector.broadcast %cst_24 : f32 to vector<8x8x128xf32>
    %72 = arith.subf %18, %71 : vector<8x8x128xf32>
    %73 = math.absf %72 : vector<8x8x128xf32>
    %cst_25 = arith.constant 1.000000e+00 : f32
    %74 = vector.broadcast %cst_25 : f32 to vector<8x8x128xf32>
    %75 = arith.subf %74, %73 : vector<8x8x128xf32>
    %cst_26 = arith.constant 0.000000e+00 : f32
    %76 = vector.broadcast %cst_26 : f32 to vector<8x8x128xf32>
    %77 = arith.maximumf %76, %75 : vector<8x8x128xf32>
    %78 = vector.shape_cast %30 : vector<8x128xf32> to vector<1x8x128xf32>
    %79 = vector.broadcast %78 : vector<1x8x128xf32> to vector<8x8x128xf32>
    %80 = arith.mulf %79, %77 : vector<8x8x128xf32>
    %cst_27 = arith.constant dense<0.000000e+00> : vector<8x128xf32>
    %81 = vector.multi_reduction <add>, %80, %cst_27 [1] : vector<8x8x128xf32> to vector<8x128xf32>
    %82 = arith.addf %70, %81 : vector<8x128xf32>
    %cst_28 = arith.constant 4.000000e+00 : f32
    %83 = vector.broadcast %cst_28 : f32 to vector<8x8x128xf32>
    %84 = arith.subf %18, %83 : vector<8x8x128xf32>
    %85 = math.absf %84 : vector<8x8x128xf32>
    %cst_29 = arith.constant 1.000000e+00 : f32
    %86 = vector.broadcast %cst_29 : f32 to vector<8x8x128xf32>
    %87 = arith.subf %86, %85 : vector<8x8x128xf32>
    %cst_30 = arith.constant 0.000000e+00 : f32
    %88 = vector.broadcast %cst_30 : f32 to vector<8x8x128xf32>
    %89 = arith.maximumf %88, %87 : vector<8x8x128xf32>
    %90 = vector.shape_cast %33 : vector<8x128xf32> to vector<1x8x128xf32>
    %91 = vector.broadcast %90 : vector<1x8x128xf32> to vector<8x8x128xf32>
    %92 = arith.mulf %91, %89 : vector<8x8x128xf32>
    %cst_31 = arith.constant dense<0.000000e+00> : vector<8x128xf32>
    %93 = vector.multi_reduction <add>, %92, %cst_31 [1] : vector<8x8x128xf32> to vector<8x128xf32>
    %94 = arith.addf %82, %93 : vector<8x128xf32>
    %c0_32 = arith.constant 0 : index
    %c0_33 = arith.constant 0 : index
    %95 = vector.load %arg6[%c0_32, %c0_33] : memref<8x128xf32, #tpu.memory_space<vmem>>, vector<8x128xf32>
    tpu.vector_store %arg6[%c0_32, %c0_33], %94 {strides = array<i32>} : memref<8x128xf32, #tpu.memory_space<vmem>>, vector<8x128xf32>,
    return
  }
  func.func @transform_0(%arg0: i32, %arg1: i32) -> (i32, i32) {
    %c0_i32 = arith.constant 0 : i32
    %c0_i32_0 = arith.constant 0 : i32
    return %arg0, %c0_i32 : i32, i32
  }
  func.func @transform_1(%arg0: i32, %arg1: i32) -> (i32, i32) {
    %c0_i32 = arith.constant 0 : i32
    %c0_i32_0 = arith.constant 0 : i32
    return %c0_i32, %arg1 : i32, i32
  }
  func.func @transform_2(%arg0: i32, %arg1: i32) -> (i32, i32) {
    %c0_i32 = arith.constant 0 : i32
    %c0_i32_0 = arith.constant 0 : i32
    return %c0_i32, %arg1 : i32, i32
  }
  func.func @transform_3(%arg0: i32, %arg1: i32) -> (i32, i32) {
    %c0_i32 = arith.constant 0 : i32
    %c0_i32_0 = arith.constant 0 : i32
    %c0_i32_1 = arith.constant 0 : i32
    return %c0_i32, %c0_i32_0 : i32, i32
  }
  func.func @transform_4(%arg0: i32, %arg1: i32) -> (i32, i32) {
    %c0_i32 = arith.constant 0 : i32
    return %arg0, %arg1 : i32, i32
  }
}

</mosaic_0001>

<llo_original>
// kernel: tpu_custom_call.1
$region0: #{tpu_custom_call.1}
  #allocation0 [shape = 'u32[]', space=smem, size = 0x4, offset = 0x4, fixed_abs, tag = 'smem constant byte address 0x4 - core index']
  #allocation1 [shape = 'u32[144,128]{1,0:T(1,128)}', space=vmem, size = 0x12000, scoped, tag = 'internal scratch']
  %s0 = inlined_call_operand.vmem [shape: f32[16,8], index: 0, kind: input, shape index: {}]
  %s1 = inlined_call_operand.vmem [shape: f32[1,256], index: 1, kind: input, shape index: {}]
  %s2 = inlined_call_operand.vmem [shape: f32[8,256], index: 2, kind: input, shape index: {}]
  %s3 = inlined_call_operand.vmem [shape: f32[8,5], index: 3, kind: input, shape index: {}]
  %s4 = inlined_call_operand.hbm [shape: f32[16,256], index: 4, kind: output, shape index: {}]
  %s5 = sld [smem:[#allocation0]]
  $region49: #{tpu_custom_call.1} parent=0
    _
  %s7 = ssub.s32 1, %s5
  %s8 = scalar_select 0, %s7, %s5
  $region1: #{tpu_custom_call.1} parent=0
    #allocation2 [shape = 'u8[8192]{0}', space=vmem, size = 0x2000, scoped, tag = 'output window, operand 0']
    #allocation3 [shape = 's32[2]{0}', space=sflag, size = 0x8, scoped, tag = 'scoped memory for tpu_custom_call.1']
    %9 = vsyncpa [#allocation3], 0
    %s10 = scalar_lea.sflag [#allocation3], 1
    %11 = vsyncpa %s10, 0
    loop: start=0, step=1, limit=6
    $region2: #{tpu_custom_call.1} parent=1 // loop_pre_header
      _
    $region3: #{tpu_custom_call.1} parent=1 // loop_header
      %s13 = sphi 0, %s17
      %p14 = scmp.ge.s32.totalorder %s13, 6
      %s20 = sphi 0, %s32
      %s21 = sphi 0, %s28
      %s22 = sphi 0, %s20
      %s23 = sphi 0, %s21
      %s24 = sphi 0, %s22
      %s25 = sphi 0, %s23
      %s35 = sphi 0, %s37
      %s38 = sphi 0, %s35
      %s39 = sphi 0, %s38
      %s55 = sphi 0, %s39
      %s61 = sphi 0, %s63
      %s64 = sphi 0, %s61
      %s65 = sphi 0, %s64
      %s81 = sphi 0, %s65
      %s87 = sphi 0, %s89
      %s90 = sphi 0, %s87
      %s91 = sphi 0, %s90
      %s107 = sphi 0, %s91
      %s111 = sphi 0, %s111
      %s113 = sphi 0, %s111
      %s114 = sphi 0, %s113
      %s128 = sphi 0, %s114
      %s136 = sphi 0, %s138
      %s139 = sphi 0, %s136
      %s140 = sphi 0, %s139
      %s156 = sphi 0, %s140
    $region4: #{tpu_custom_call.1} parent=1 // loop_header_branch
      %16 = sbr.rel (%p14) target = $region8
    $region5: #{tpu_custom_call.1} parent=1 // loop_body
      %s18 = ssub.s32 %s13, 1
      %s19 = ssub.s32 %s13, 2
      %s26 = sadd.s32 1, %s21
      %p27 = scmp.ge.s32.totalorder %s26, 2
      %s28 = scalar_select %p27, 0, %s26
      %s29 = sadd.s32 1, %s20
      %s30 = scalar_select %p27, %s29, %s20
      %p31 = scmp.ge.s32.totalorder %s30, 2
      %s32 = scalar_select %p31, 0, %s30
      %s33 = ssub.s32 %s20, %s32
      %p34 = scmp.eq.s32.totalorder %s33, 0
      %s36 = sadd.s32 %s35, 1
      %s37 = scalar_select %p34, %s35, %s36
      %p40 = pneg %p34
      %p41 = scmp.eq.s32.totalorder %s13, 3
      %p42 = por %p40, %p41
      %p43 = scmp.ne.s32.totalorder %s35, %s38
      %p44 = scmp.eq.s32.totalorder %s13, 0
      %p45 = por %p43, %p44
      %p46 = scmp.ne.s32.totalorder %s35, %s38
      %p47 = scmp.eq.s32.totalorder %s18, 3
      %p48 = por %p46, %p47
      %p49 = scmp.ne.s32.totalorder %s38, %s39
      %p50 = scmp.eq.s32.totalorder %s18, 0
      %p51 = por %p49, %p50
      %p52 = scmp.ne.s32.totalorder %s38, %s39
      %p53 = scmp.eq.s32.totalorder %s19, 3
      %p54 = por %p52, %p53
      %p56 = scmp.ne.s32.totalorder %s39, %s55
      %p57 = scmp.eq.s32.totalorder %s19, 0
      %p58 = por %p56, %p57
      %s59 = ssub.s32 %s21, %s28
      %p60 = scmp.eq.s32.totalorder %s59, 0
      %s62 = sadd.s32 %s61, 1
      %s63 = scalar_select %p60, %s61, %s62
      %p66 = pneg %p60
      %p67 = scmp.eq.s32.totalorder %s13, 3
      %p68 = por %p66, %p67
      %p69 = scmp.ne.s32.totalorder %s61, %s64
      %p70 = scmp.eq.s32.totalorder %s13, 0
      %p71 = por %p69, %p70
      %p72 = scmp.ne.s32.totalorder %s61, %s64
      %p73 = scmp.eq.s32.totalorder %s18, 3
      %p74 = por %p72, %p73
      %p75 = scmp.ne.s32.totalorder %s64, %s65
      %p76 = scmp.eq.s32.totalorder %s18, 0
      %p77 = por %p75, %p76
      %p78 = scmp.ne.s32.totalorder %s64, %s65
      %p79 = scmp.eq.s32.totalorder %s19, 3
      %p80 = por %p78, %p79
      %p82 = scmp.ne.s32.totalorder %s65, %s81
      %p83 = scmp.eq.s32.totalorder %s19, 0
      %p84 = por %p82, %p83
      %s85 = ssub.s32 %s21, %s28
      %p86 = scmp.eq.s32.totalorder %s85, 0
      %s88 = sadd.s32 %s87, 1
      %s89 = scalar_select %p86, %s87, %s88
      %p92 = pneg %p86
      %p93 = scmp.eq.s32.totalorder %s13, 3
      %p94 = por %p92, %p93
      %p95 = scmp.ne.s32.totalorder %s87, %s90
      %p96 = scmp.eq.s32.totalorder %s13, 0
      %p97 = por %p95, %p96
      %p98 = scmp.ne.s32.totalorder %s87, %s90
      %p99 = scmp.eq.s32.totalorder %s18, 3
      %p100 = por %p98, %p99
      %p101 = scmp.ne.s32.totalorder %s90, %s91
      %p102 = scmp.eq.s32.totalorder %s18, 0
      %p103 = por %p101, %p102
      %p104 = scmp.ne.s32.totalorder %s90, %s91
      %p105 = scmp.eq.s32.totalorder %s19, 3
      %p106 = por %p104, %p105
      %p108 = scmp.ne.s32.totalorder %s91, %s107
      %p109 = scmp.eq.s32.totalorder %s19, 0
      %p110 = por %p108, %p109
      %s112 = sadd.s32 %s111, 1
      %p115 = scmp.eq.s32.totalorder %s13, 3
      %p116 = scmp.ne.s32.totalorder %s111, %s113
      %p117 = scmp.eq.s32.totalorder %s13, 0
      %p118 = por %p116, %p117
      %p119 = scmp.ne.s32.totalorder %s111, %s113
      %p120 = scmp.eq.s32.totalorder %s18, 3
      %p121 = por %p119, %p120
      %p122 = scmp.ne.s32.totalorder %s113, %s114
      %p123 = scmp.eq.s32.totalorder %s18, 0
      %p124 = por %p122, %p123
      %p125 = scmp.ne.s32.totalorder %s113, %s114
      %p126 = scmp.eq.s32.totalorder %s19, 3
      %p127 = por %p125, %p126
      %p129 = scmp.ne.s32.totalorder %s114, %s128
      %p130 = scmp.eq.s32.totalorder %s19, 0
      %p131 = por %p129, %p130
      %s132 = ssub.s32 %s20, %s32
      %s133 = ssub.s32 %s21, %s28
      %s134 = sor.u32 %s132, %s133
      %p135 = scmp.eq.s32.totalorder %s134, 0
      %s137 = sadd.s32 %s136, 1
      %s138 = scalar_select %p135, %s136, %s137
      %p141 = pneg %p135
      %p142 = scmp.eq.s32.totalorder %s13, 3
      %p143 = por %p141, %p142
      %p144 = scmp.ne.s32.totalorder %s136, %s139
      %p145 = scmp.eq.s32.totalorder %s13, 0
      %p146 = por %p144, %p145
      %p147 = scmp.ne.s32.totalorder %s136, %s139
      %p148 = scmp.eq.s32.totalorder %s18, 3
      %p149 = por %p147, %p148
      %p150 = scmp.ne.s32.totalorder %s139, %s140
      %p151 = scmp.eq.s32.totalorder %s18, 0
      %p152 = por %p150, %p151
      %p153 = scmp.ne.s32.totalorder %s139, %s140
      %p154 = scmp.eq.s32.totalorder %s19, 3
      %p155 = por %p153, %p154
      %p157 = scmp.ne.s32.totalorder %s140, %s156
      %p158 = scmp.eq.s32.totalorder %s19, 0
      %p159 = por %p157, %p158
      %p160 = scmp.le.s32.totalorder 1, %s13
      %p161 = scmp.lt.s32.totalorder %s13, 5
      %p162 = pnand %p160, %p161
      %p163 = pneg %p162
      // Predicated region
      $region9: #{tpu_custom_call.1} parent=5 // pred_check
        _
      $region10: #{tpu_custom_call.1} parent=5 // pred_check_branch
        %165 = sbr.rel (%p162) target = $region12
      $region11: #{tpu_custom_call.1} parent=5 // pred_region
        %s166 = ssub.s32 %s13, 1
        // Predicated region
        $region13: #{tpu_custom_call.1} parent=11 // pred_check
          %p167 = pneg %p124
        $region14: #{tpu_custom_call.1} parent=11 // pred_check_branch
          %169 = sbr.rel (%p167) target = $region16
        $region15: #{tpu_custom_call.1} parent=11 // pred_region
          _
        $region16: #{tpu_custom_call.1} parent=11 // pred_fallthru
          _
      $region12: #{tpu_custom_call.1} parent=5 // pred_fallthru
        _
      %p170 = scmp.lt.s32.totalorder %s13, 4
      // Predicated region
      $region17: #{tpu_custom_call.1} parent=5 // pred_check
        %p171 = pneg %p170
      $region18: #{tpu_custom_call.1} parent=5 // pred_check_branch
        %173 = sbr.rel (%p171) target = $region20
      $region19: #{tpu_custom_call.1} parent=5 // pred_region
        // Predicated region
        $region21: #{tpu_custom_call.1} parent=19 // pred_check
          %p174 = pneg %p45
        $region22: #{tpu_custom_call.1} parent=19 // pred_check_branch
          %176 = sbr.rel (%p174) target = $region24
        $region23: #{tpu_custom_call.1} parent=19 // pred_region
          %p177 = scmp.lt.s32.totalorder %s20, 1
          %s178 = scalar_select %p177, %s20, 1
          %s179 = smul.addr %s178, 8
          %s180 = scalar_lea.vmem %s0, %s179
        $region24: #{tpu_custom_call.1} parent=19 // pred_fallthru
          _
        // Predicated region
        $region25: #{tpu_custom_call.1} parent=19 // pred_check
          %p181 = pneg %p71
        $region26: #{tpu_custom_call.1} parent=19 // pred_check_branch
          %183 = sbr.rel (%p181) target = $region28
        $region27: #{tpu_custom_call.1} parent=19 // pred_region
          %p184 = scmp.lt.s32.totalorder %s21, 1
          %s185 = scalar_select %p184, %s21, 1
          %s186 = scalar_lea.vmem %s1, %s185
        $region28: #{tpu_custom_call.1} parent=19 // pred_fallthru
          _
        // Predicated region
        $region29: #{tpu_custom_call.1} parent=19 // pred_check
          %p187 = pneg %p97
        $region30: #{tpu_custom_call.1} parent=19 // pred_check_branch
          %189 = sbr.rel (%p187) target = $region32
        $region31: #{tpu_custom_call.1} parent=19 // pred_region
          %p190 = scmp.lt.s32.totalorder %s21, 1
          %s191 = scalar_select %p190, %s21, 1
          %s192 = smul.addr %s191, 8
          %s193 = scalar_lea.vmem %s2, %s192
        $region32: #{tpu_custom_call.1} parent=19 // pred_fallthru
          _
      $region20: #{tpu_custom_call.1} parent=5 // pred_fallthru
        _
      %p194 = scmp.le.s32.totalorder 1, %s13
      %p195 = scmp.lt.s32.totalorder %s13, 5
      %p196 = pnand %p194, %p195
      %p197 = pneg %p196
      // Predicated region
      $region33: #{tpu_custom_call.1} parent=5 // pred_check
        _
      $region34: #{tpu_custom_call.1} parent=5 // pred_check_branch
        %199 = sbr.rel (%p196) target = $region36
      $region35: #{tpu_custom_call.1} parent=5 // pred_region
        %s200 = ssub.s32 %s13, 1
        %p201 = scmp.lt.s32.totalorder %s22, 1
        %s202 = scalar_select %p201, %s22, 1
        %s203 = smul.addr %s202, 8
        %s204 = scalar_lea.vmem %s0, %s203
        %p205 = pneg %p51
        %p206 = pneg %p48
        %p207 = scmp.lt.s32.totalorder %s23, 1
        %s208 = scalar_select %p207, %s23, 1
        %s209 = scalar_lea.vmem %s1, %s208
        %p210 = pneg %p77
        %p211 = pneg %p74
        %p212 = scmp.lt.s32.totalorder %s23, 1
        %s213 = scalar_select %p212, %s23, 1
        %s214 = smul.addr %s213, 8
        %s215 = scalar_lea.vmem %s2, %s214
        %p216 = pneg %p103
        %p217 = pneg %p100
        %p218 = pneg %p124
        %p219 = pneg %p121
        %p220 = pneg %p152
        %p221 = pneg %p149
        %s222 = sand.u32 %s139, 1
        %s223 = scalar_lea.sflag [#allocation3], %s222
        %s224 = sand.u32 %s139, 1
        %s225 = smul.addr %s224, 8
        %s226 = scalar_lea.vmem [#allocation2], %s225
        %p227 = scmp.lt.s32.totalorder %s22, 1
        %s228 = scalar_select %p227, %s22, 1
        %s229 = smul.addr %s228, 8
        %s230 = scalar_lea.vmem %s0, %s229
        %p231 = scmp.lt.s32.totalorder %s23, 1
        %s232 = scalar_select %p231, %s23, 1
        %s233 = scalar_lea.vmem %s1, %s232
        %p234 = scmp.lt.s32.totalorder %s23, 1
        %s235 = scalar_select %p234, %s23, 1
        %s236 = smul.addr %s235, 8
        %s237 = scalar_lea.vmem %s2, %s236
        %v238 = vld [vmem:[%s230] sm:$0xff]
        %v239 = vsub.f32 %v238, -3.0
        %v240 = vmul.f32 %v239, 0.6666667
        %v241 = vld [vmem:[%s233] sm:$0x1]
        %v242 = vmul.f32 %v241, 0.6666667
        %v243 = vld [vmem:[%s237] sm:$0xff]
        %v244 = vld [vmem:[%s3] sm:$0xff]
        %v245 = vlaneseq
        %v246 = vshrl.u32 %v245, 7
        %v247 = vsub.s32 0, %v246
        %v248 = vrot.slane %v240, %v247
        %250 = vbcast.lane.b32.xlu0 %v248, 256
        %v251 = vpop.permute.xlu0 %250
        %v252 = vlaneseq
        %v253 = vshrl.u32 %v252, 7
        %v254 = vsub.s32 1, %v253
        %v255 = vrot.slane %v240, %v254
        %257 = vbcast.lane.b32.xlu0 %v255, 256
        %v258 = vpop.permute.xlu0 %257
        %v259 = vlaneseq
        %v260 = vshrl.u32 %v259, 7
        %v261 = vsub.s32 2, %v260
        %v262 = vrot.slane %v240, %v261
        %264 = vbcast.lane.b32.xlu0 %v262, 256
        %v265 = vpop.permute.xlu0 %264
        %v266 = vlaneseq
        %v267 = vshrl.u32 %v266, 7
        %v268 = vsub.s32 3, %v267
        %v269 = vrot.slane %v240, %v268
        %271 = vbcast.lane.b32.xlu0 %v269, 256
        %v272 = vpop.permute.xlu0 %271
        %v273 = vlaneseq
        %v274 = vshrl.u32 %v273, 7
        %v275 = vsub.s32 4, %v274
        %v276 = vrot.slane %v240, %v275
        %278 = vbcast.lane.b32.xlu0 %v276, 256
        %v279 = vpop.permute.xlu0 %278
        %v280 = vlaneseq
        %v281 = vshrl.u32 %v280, 7
        %v282 = vsub.s32 5, %v281
        %v283 = vrot.slane %v240, %v282
        %285 = vbcast.lane.b32.xlu0 %v283, 256
        %v286 = vpop.permute.xlu0 %285
        %v287 = vlaneseq
        %v288 = vshrl.u32 %v287, 7
        %v289 = vsub.s32 6, %v288
        %v290 = vrot.slane %v240, %v289
        %292 = vbcast.lane.b32.xlu0 %v290, 256
        %v293 = vpop.permute.xlu0 %292
        %v294 = vlaneseq
        %v295 = vshrl.u32 %v294, 7
        %v296 = vsub.s32 7, %v295
        %v297 = vrot.slane %v240, %v296
        %299 = vbcast.lane.b32.xlu0 %v297, 256
        %v300 = vpop.permute.xlu0 %299
        %v302 = vlaneseq
        %v303 = vshrl.u32 %v302, 7
        %v304 = vsub.s32 0, %v303
        %v305 = vrot.slane %v242, %v304
        %v307 = vadd.f32 %v251, %v305
        %v308 = vadd.f32 %v258, %v305
        %v309 = vadd.f32 %v265, %v305
        %v310 = vadd.f32 %v272, %v305
        %v311 = vadd.f32 %v279, %v305
        %v312 = vadd.f32 %v286, %v305
        %v313 = vadd.f32 %v293, %v305
        %v314 = vadd.f32 %v300, %v305
        %v315 = vmax.f32 %v307, 0.0
        %v316 = vmax.f32 %v308, 0.0
        %v317 = vmax.f32 %v309, 0.0
        %v318 = vmax.f32 %v310, 0.0
        %v319 = vmax.f32 %v311, 0.0
        %v320 = vmax.f32 %v312, 0.0
        %v321 = vmax.f32 %v313, 0.0
        %v322 = vmax.f32 %v314, 0.0
        %v323 = vmin.f32 %v315, 4.0
        %v324 = vmin.f32 %v316, 4.0
        %v325 = vmin.f32 %v317, 4.0
        %v326 = vmin.f32 %v318, 4.0
        %v327 = vmin.f32 %v319, 4.0
        %v328 = vmin.f32 %v320, 4.0
        %v329 = vmin.f32 %v321, 4.0
        %v330 = vmin.f32 %v322, 4.0
        %332 = vset.pattern.permute.xlu0 0
        %333 = vperm.xlu0 %332, %v244
        %v334 = vpop.permute.xlu0 %333
        %v336 = vmul.f32 %v243, %v334
        %337 = vset.pattern.permute.xlu0 1
        %338 = vperm.xlu0 %337, %v244
        %v339 = vpop.permute.xlu0 %338
        %v341 = vmul.f32 %v243, %v339
        %342 = vset.pattern.permute.xlu0 2
        %343 = vperm.xlu0 %342, %v244
        %v344 = vpop.permute.xlu0 %343
        %v346 = vmul.f32 %v243, %v344
        %347 = vset.pattern.permute.xlu0 3
        %348 = vperm.xlu0 %347, %v244
        %v349 = vpop.permute.xlu0 %348
        %v351 = vmul.f32 %v243, %v349
        %352 = vset.pattern.permute.xlu0 4
        %353 = vperm.xlu0 %352, %v244
        %v354 = vpop.permute.xlu0 %353
        %v356 = vmul.f32 %v243, %v354
        %v357 = vand.u32 2147483647, %v323
        %v358 = vand.u32 2147483647, %v324
        %v359 = vand.u32 2147483647, %v325
        %v360 = vand.u32 2147483647, %v326
        %v361 = vand.u32 2147483647, %v327
        %v362 = vand.u32 2147483647, %v328
        %v363 = vand.u32 2147483647, %v329
        %v364 = vand.u32 2147483647, %v330
        %v365 = vsub.f32 1.0, %v357
        %v366 = vsub.f32 1.0, %v358
        %v367 = vsub.f32 1.0, %v359
        %v368 = vsub.f32 1.0, %v360
        %v369 = vsub.f32 1.0, %v361
        %v370 = vsub.f32 1.0, %v362
        %v371 = vsub.f32 1.0, %v363
        %v372 = vsub.f32 1.0, %v364
        %v373 = vmax.f32 %v365, 0.0
        %v374 = vmax.f32 %v366, 0.0
        %v375 = vmax.f32 %v367, 0.0
        %v376 = vmax.f32 %v368, 0.0
        %v377 = vmax.f32 %v369, 0.0
        %v378 = vmax.f32 %v370, 0.0
        %v379 = vmax.f32 %v371, 0.0
        %v380 = vmax.f32 %v372, 0.0
        %v381 = vmul.f32 %v336, %v373
        %v382 = vmul.f32 %v336, %v374
        %v383 = vmul.f32 %v336, %v375
        %v384 = vmul.f32 %v336, %v376
        %v385 = vmul.f32 %v336, %v377
        %v386 = vmul.f32 %v336, %v378
        %v387 = vmul.f32 %v336, %v379
        %v388 = vmul.f32 %v336, %v380
        %v389 = vrot.slane %v381, 4
        %v390 = vadd.f32 %v381, %v389
        %v391 = vrot.slane %v390, 2
        %v392 = vadd.f32 %v390, %v391
        %v393 = vrot.slane %v392, 1
        %v394 = vadd.f32 %v392, %v393
        %v395 = vrot.slane %v382, 4
        %v396 = vadd.f32 %v382, %v395
        %v397 = vrot.slane %v396, 2
        %v398 = vadd.f32 %v396, %v397
        %v399 = vrot.slane %v398, 1
        %v400 = vadd.f32 %v398, %v399
        %v401 = vrot.slane %v383, 4
        %v402 = vadd.f32 %v383, %v401
        %v403 = vrot.slane %v402, 2
        %v404 = vadd.f32 %v402, %v403
        %v405 = vrot.slane %v404, 1
        %v406 = vadd.f32 %v404, %v405
        %v407 = vrot.slane %v384, 4
        %v408 = vadd.f32 %v384, %v407
        %v409 = vrot.slane %v408, 2
        %v410 = vadd.f32 %v408, %v409
        %v411 = vrot.slane %v410, 1
        %v412 = vadd.f32 %v410, %v411
        %v413 = vrot.slane %v385, 4
        %v414 = vadd.f32 %v385, %v413
        %v415 = vrot.slane %v414, 2
        %v416 = vadd.f32 %v414, %v415
        %v417 = vrot.slane %v416, 1
        %v418 = vadd.f32 %v416, %v417
        %v419 = vrot.slane %v386, 4
        %v420 = vadd.f32 %v386, %v419
        %v421 = vrot.slane %v420, 2
        %v422 = vadd.f32 %v420, %v421
        %v423 = vrot.slane %v422, 1
        %v424 = vadd.f32 %v422, %v423
        %v425 = vrot.slane %v387, 4
        %v426 = vadd.f32 %v387, %v425
        %v427 = vrot.slane %v426, 2
        %v428 = vadd.f32 %v426, %v427
        %v429 = vrot.slane %v428, 1
        %v430 = vadd.f32 %v428, %v429
        %v431 = vrot.slane %v388, 4
        %v432 = vadd.f32 %v388, %v431
        %v433 = vrot.slane %v432, 2
        %v434 = vadd.f32 %v432, %v433
        %v435 = vrot.slane %v434, 1
        %v436 = vadd.f32 %v434, %v435
        %v437 = vadd.f32 %v394, 0.0
        %v438 = vadd.f32 %v400, 0.0
        %v439 = vadd.f32 %v406, 0.0
        %v440 = vadd.f32 %v412, 0.0
        %v441 = vadd.f32 %v418, 0.0
        %v442 = vadd.f32 %v424, 0.0
        %v443 = vadd.f32 %v430, 0.0
        %v444 = vadd.f32 %v436, 0.0
        %v445 = vsub.f32 %v323, 1.0
        %v446 = vsub.f32 %v324, 1.0
        %v447 = vsub.f32 %v325, 1.0
        %v448 = vsub.f32 %v326, 1.0
        %v449 = vsub.f32 %v327, 1.0
        %v450 = vsub.f32 %v328, 1.0
        %v451 = vsub.f32 %v329, 1.0
        %v452 = vsub.f32 %v330, 1.0
        %v453 = vand.u32 2147483647, %v445
        %v454 = vand.u32 2147483647, %v446
        %v455 = vand.u32 2147483647, %v447
        %v456 = vand.u32 2147483647, %v448
        %v457 = vand.u32 2147483647, %v449
        %v458 = vand.u32 2147483647, %v450
        %v459 = vand.u32 2147483647, %v451
        %v460 = vand.u32 2147483647, %v452
        %v461 = vsub.f32 1.0, %v453
        %v462 = vsub.f32 1.0, %v454
        %v463 = vsub.f32 1.0, %v455
        %v464 = vsub.f32 1.0, %v456
        %v465 = vsub.f32 1.0, %v457
        %v466 = vsub.f32 1.0, %v458
        %v467 = vsub.f32 1.0, %v459
        %v468 = vsub.f32 1.0, %v460
        %v469 = vmax.f32 %v461, 0.0
        %v470 = vmax.f32 %v462, 0.0
        %v471 = vmax.f32 %v463, 0.0
        %v472 = vmax.f32 %v464, 0.0
        %v473 = vmax.f32 %v465, 0.0
        %v474 = vmax.f32 %v466, 0.0
        %v475 = vmax.f32 %v467, 0.0
        %v476 = vmax.f32 %v468, 0.0
        %v477 = vmul.f32 %v341, %v469
        %v478 = vmul.f32 %v341, %v470
        %v479 = vmul.f32 %v341, %v471
        %v480 = vmul.f32 %v341, %v472
        %v481 = vmul.f32 %v341, %v473
        %v482 = vmul.f32 %v341, %v474
        %v483 = vmul.f32 %v341, %v475
        %v484 = vmul.f32 %v341, %v476
        %v485 = vrot.slane %v477, 4
        %v486 = vadd.f32 %v477, %v485
        %v487 = vrot.slane %v486, 2
        %v488 = vadd.f32 %v486, %v487
        %v489 = vrot.slane %v488, 1
        %v490 = vadd.f32 %v488, %v489
        %v491 = vrot.slane %v478, 4
        %v492 = vadd.f32 %v478, %v491
        %v493 = vrot.slane %v492, 2
        %v494 = vadd.f32 %v492, %v493
        %v495 = vrot.slane %v494, 1
        %v496 = vadd.f32 %v494, %v495
        %v497 = vrot.slane %v479, 4
        %v498 = vadd.f32 %v479, %v497
        %v499 = vrot.slane %v498, 2
        %v500 = vadd.f32 %v498, %v499
        %v501 = vrot.slane %v500, 1
        %v502 = vadd.f32 %v500, %v501
        %v503 = vrot.slane %v480, 4
        %v504 = vadd.f32 %v480, %v503
        %v505 = vrot.slane %v504, 2
        %v506 = vadd.f32 %v504, %v505
        %v507 = vrot.slane %v506, 1
        %v508 = vadd.f32 %v506, %v507
        %v509 = vrot.slane %v481, 4
        %v510 = vadd.f32 %v481, %v509
        %v511 = vrot.slane %v510, 2
        %v512 = vadd.f32 %v510, %v511
        %v513 = vrot.slane %v512, 1
        %v514 = vadd.f32 %v512, %v513
        %v515 = vrot.slane %v482, 4
        %v516 = vadd.f32 %v482, %v515
        %v517 = vrot.slane %v516, 2
        %v518 = vadd.f32 %v516, %v517
        %v519 = vrot.slane %v518, 1
        %v520 = vadd.f32 %v518, %v519
        %v521 = vrot.slane %v483, 4
        %v522 = vadd.f32 %v483, %v521
        %v523 = vrot.slane %v522, 2
        %v524 = vadd.f32 %v522, %v523
        %v525 = vrot.slane %v524, 1
        %v526 = vadd.f32 %v524, %v525
        %v527 = vrot.slane %v484, 4
        %v528 = vadd.f32 %v484, %v527
        %v529 = vrot.slane %v528, 2
        %v530 = vadd.f32 %v528, %v529
        %v531 = vrot.slane %v530, 1
        %v532 = vadd.f32 %v530, %v531
        %v533 = vadd.f32 %v437, %v490
        %v534 = vadd.f32 %v438, %v496
        %v535 = vadd.f32 %v439, %v502
        %v536 = vadd.f32 %v440, %v508
        %v537 = vadd.f32 %v441, %v514
        %v538 = vadd.f32 %v442, %v520
        %v539 = vadd.f32 %v443, %v526
        %v540 = vadd.f32 %v444, %v532
        %v541 = vsub.f32 %v323, 2.0
        %v542 = vsub.f32 %v324, 2.0
        %v543 = vsub.f32 %v325, 2.0
        %v544 = vsub.f32 %v326, 2.0
        %v545 = vsub.f32 %v327, 2.0
        %v546 = vsub.f32 %v328, 2.0
        %v547 = vsub.f32 %v329, 2.0
        %v548 = vsub.f32 %v330, 2.0
        %v549 = vand.u32 2147483647, %v541
        %v550 = vand.u32 2147483647, %v542
        %v551 = vand.u32 2147483647, %v543
        %v552 = vand.u32 2147483647, %v544
        %v553 = vand.u32 2147483647, %v545
        %v554 = vand.u32 2147483647, %v546
        %v555 = vand.u32 2147483647, %v547
        %v556 = vand.u32 2147483647, %v548
        %v557 = vsub.f32 1.0, %v549
        %v558 = vsub.f32 1.0, %v550
        %v559 = vsub.f32 1.0, %v551
        %v560 = vsub.f32 1.0, %v552
        %v561 = vsub.f32 1.0, %v553
        %v562 = vsub.f32 1.0, %v554
        %v563 = vsub.f32 1.0, %v555
        %v564 = vsub.f32 1.0, %v556
        %v565 = vmax.f32 %v557, 0.0
        %v566 = vmax.f32 %v558, 0.0
        %v567 = vmax.f32 %v559, 0.0
        %v568 = vmax.f32 %v560, 0.0
        %v569 = vmax.f32 %v561, 0.0
        %v570 = vmax.f32 %v562, 0.0
        %v571 = vmax.f32 %v563, 0.0
        %v572 = vmax.f32 %v564, 0.0
        %v573 = vmul.f32 %v346, %v565
        %v574 = vmul.f32 %v346, %v566
        %v575 = vmul.f32 %v346, %v567
        %v576 = vmul.f32 %v346, %v568
        %v577 = vmul.f32 %v346, %v569
        %v578 = vmul.f32 %v346, %v570
        %v579 = vmul.f32 %v346, %v571
        %v580 = vmul.f32 %v346, %v572
        %v581 = vrot.slane %v573, 4
        %v582 = vadd.f32 %v573, %v581
        %v583 = vrot.slane %v582, 2
        %v584 = vadd.f32 %v582, %v583
        %v585 = vrot.slane %v584, 1
        %v586 = vadd.f32 %v584, %v585
        %v587 = vrot.slane %v574, 4
        %v588 = vadd.f32 %v574, %v587
        %v589 = vrot.slane %v588, 2
        %v590 = vadd.f32 %v588, %v589
        %v591 = vrot.slane %v590, 1
        %v592 = vadd.f32 %v590, %v591
        %v593 = vrot.slane %v575, 4
        %v594 = vadd.f32 %v575, %v593
        %v595 = vrot.slane %v594, 2
        %v596 = vadd.f32 %v594, %v595
        %v597 = vrot.slane %v596, 1
        %v598 = vadd.f32 %v596, %v597
        %v599 = vrot.slane %v576, 4
        %v600 = vadd.f32 %v576, %v599
        %v601 = vrot.slane %v600, 2
        %v602 = vadd.f32 %v600, %v601
        %v603 = vrot.slane %v602, 1
        %v604 = vadd.f32 %v602, %v603
        %v605 = vrot.slane %v577, 4
        %v606 = vadd.f32 %v577, %v605
        %v607 = vrot.slane %v606, 2
        %v608 = vadd.f32 %v606, %v607
        %v609 = vrot.slane %v608, 1
        %v610 = vadd.f32 %v608, %v609
        %v611 = vrot.slane %v578, 4
        %v612 = vadd.f32 %v578, %v611
        %v613 = vrot.slane %v612, 2
        %v614 = vadd.f32 %v612, %v613
        %v615 = vrot.slane %v614, 1
        %v616 = vadd.f32 %v614, %v615
        %v617 = vrot.slane %v579, 4
        %v618 = vadd.f32 %v579, %v617
        %v619 = vrot.slane %v618, 2
        %v620 = vadd.f32 %v618, %v619
        %v621 = vrot.slane %v620, 1
        %v622 = vadd.f32 %v620, %v621
        %v623 = vrot.slane %v580, 4
        %v624 = vadd.f32 %v580, %v623
        %v625 = vrot.slane %v624, 2
        %v626 = vadd.f32 %v624, %v625
        %v627 = vrot.slane %v626, 1
        %v628 = vadd.f32 %v626, %v627
        %v629 = vadd.f32 %v533, %v586
        %v630 = vadd.f32 %v534, %v592
        %v631 = vadd.f32 %v535, %v598
        %v632 = vadd.f32 %v536, %v604
        %v633 = vadd.f32 %v537, %v610
        %v634 = vadd.f32 %v538, %v616
        %v635 = vadd.f32 %v539, %v622
        %v636 = vadd.f32 %v540, %v628
        %v637 = vsub.f32 %v323, 3.0
        %v638 = vsub.f32 %v324, 3.0
        %v639 = vsub.f32 %v325, 3.0
        %v640 = vsub.f32 %v326, 3.0
        %v641 = vsub.f32 %v327, 3.0
        %v642 = vsub.f32 %v328, 3.0
        %v643 = vsub.f32 %v329, 3.0
        %v644 = vsub.f32 %v330, 3.0
        %v645 = vand.u32 2147483647, %v637
        %v646 = vand.u32 2147483647, %v638
        %v647 = vand.u32 2147483647, %v639
        %v648 = vand.u32 2147483647, %v640
        %v649 = vand.u32 2147483647, %v641
        %v650 = vand.u32 2147483647, %v642
        %v651 = vand.u32 2147483647, %v643
        %v652 = vand.u32 2147483647, %v644
        %v653 = vsub.f32 1.0, %v645
        %v654 = vsub.f32 1.0, %v646
        %v655 = vsub.f32 1.0, %v647
        %v656 = vsub.f32 1.0, %v648
        %v657 = vsub.f32 1.0, %v649
        %v658 = vsub.f32 1.0, %v650
        %v659 = vsub.f32 1.0, %v651
        %v660 = vsub.f32 1.0, %v652
        %v661 = vmax.f32 %v653, 0.0
        %v662 = vmax.f32 %v654, 0.0
        %v663 = vmax.f32 %v655, 0.0
        %v664 = vmax.f32 %v656, 0.0
        %v665 = vmax.f32 %v657, 0.0
        %v666 = vmax.f32 %v658, 0.0
        %v667 = vmax.f32 %v659, 0.0
        %v668 = vmax.f32 %v660, 0.0
        %v669 = vmul.f32 %v351, %v661
        %v670 = vmul.f32 %v351, %v662
        %v671 = vmul.f32 %v351, %v663
        %v672 = vmul.f32 %v351, %v664
        %v673 = vmul.f32 %v351, %v665
        %v674 = vmul.f32 %v351, %v666
        %v675 = vmul.f32 %v351, %v667
        %v676 = vmul.f32 %v351, %v668
        %v677 = vrot.slane %v669, 4
        %v678 = vadd.f32 %v669, %v677
        %v679 = vrot.slane %v678, 2
        %v680 = vadd.f32 %v678, %v679
        %v681 = vrot.slane %v680, 1
        %v682 = vadd.f32 %v680, %v681
        %v683 = vrot.slane %v670, 4
        %v684 = vadd.f32 %v670, %v683
        %v685 = vrot.slane %v684, 2
        %v686 = vadd.f32 %v684, %v685
        %v687 = vrot.slane %v686, 1
        %v688 = vadd.f32 %v686, %v687
        %v689 = vrot.slane %v671, 4
        %v690 = vadd.f32 %v671, %v689
        %v691 = vrot.slane %v690, 2
        %v692 = vadd.f32 %v690, %v691
        %v693 = vrot.slane %v692, 1
        %v694 = vadd.f32 %v692, %v693
        %v695 = vrot.slane %v672, 4
        %v696 = vadd.f32 %v672, %v695
        %v697 = vrot.slane %v696, 2
        %v698 = vadd.f32 %v696, %v697
        %v699 = vrot.slane %v698, 1
        %v700 = vadd.f32 %v698, %v699
        %v701 = vrot.slane %v673, 4
        %v702 = vadd.f32 %v673, %v701
        %v703 = vrot.slane %v702, 2
        %v704 = vadd.f32 %v702, %v703
        %v705 = vrot.slane %v704, 1
        %v706 = vadd.f32 %v704, %v705
        %v707 = vrot.slane %v674, 4
        %v708 = vadd.f32 %v674, %v707
        %v709 = vrot.slane %v708, 2
        %v710 = vadd.f32 %v708, %v709
        %v711 = vrot.slane %v710, 1
        %v712 = vadd.f32 %v710, %v711
        %v713 = vrot.slane %v675, 4
        %v714 = vadd.f32 %v675, %v713
        %v715 = vrot.slane %v714, 2
        %v716 = vadd.f32 %v714, %v715
        %v717 = vrot.slane %v716, 1
        %v718 = vadd.f32 %v716, %v717
        %v719 = vrot.slane %v676, 4
        %v720 = vadd.f32 %v676, %v719
        %v721 = vrot.slane %v720, 2
        %v722 = vadd.f32 %v720, %v721
        %v723 = vrot.slane %v722, 1
        %v724 = vadd.f32 %v722, %v723
        %v725 = vadd.f32 %v629, %v682
        %v726 = vadd.f32 %v630, %v688
        %v727 = vadd.f32 %v631, %v694
        %v728 = vadd.f32 %v632, %v700
        %v729 = vadd.f32 %v633, %v706
        %v730 = vadd.f32 %v634, %v712
        %v731 = vadd.f32 %v635, %v718
        %v732 = vadd.f32 %v636, %v724
        %v733 = vsub.f32 %v323, 4.0
        %v734 = vsub.f32 %v324, 4.0
        %v735 = vsub.f32 %v325, 4.0
        %v736 = vsub.f32 %v326, 4.0
        %v737 = vsub.f32 %v327, 4.0
        %v738 = vsub.f32 %v328, 4.0
        %v739 = vsub.f32 %v329, 4.0
        %v740 = vsub.f32 %v330, 4.0
        %v741 = vand.u32 2147483647, %v733
        %v742 = vand.u32 2147483647, %v734
        %v743 = vand.u32 2147483647, %v735
        %v744 = vand.u32 2147483647, %v736
        %v745 = vand.u32 2147483647, %v737
        %v746 = vand.u32 2147483647, %v738
        %v747 = vand.u32 2147483647, %v739
        %v748 = vand.u32 2147483647, %v740
        %v749 = vsub.f32 1.0, %v741
        %v750 = vsub.f32 1.0, %v742
        %v751 = vsub.f32 1.0, %v743
        %v752 = vsub.f32 1.0, %v744
        %v753 = vsub.f32 1.0, %v745
        %v754 = vsub.f32 1.0, %v746
        %v755 = vsub.f32 1.0, %v747
        %v756 = vsub.f32 1.0, %v748
        %v757 = vmax.f32 %v749, 0.0
        %v758 = vmax.f32 %v750, 0.0
        %v759 = vmax.f32 %v751, 0.0
        %v760 = vmax.f32 %v752, 0.0
        %v761 = vmax.f32 %v753, 0.0
        %v762 = vmax.f32 %v754, 0.0
        %v763 = vmax.f32 %v755, 0.0
        %v764 = vmax.f32 %v756, 0.0
        %v765 = vmul.f32 %v356, %v757
        %v766 = vmul.f32 %v356, %v758
        %v767 = vmul.f32 %v356, %v759
        %v768 = vmul.f32 %v356, %v760
        %v769 = vmul.f32 %v356, %v761
        %v770 = vmul.f32 %v356, %v762
        %v771 = vmul.f32 %v356, %v763
        %v772 = vmul.f32 %v356, %v764
        %v773 = vrot.slane %v765, 4
        %v774 = vadd.f32 %v765, %v773
        %v775 = vrot.slane %v774, 2
        %v776 = vadd.f32 %v774, %v775
        %v777 = vrot.slane %v776, 1
        %v778 = vadd.f32 %v776, %v777
        %v779 = vrot.slane %v766, 4
        %v780 = vadd.f32 %v766, %v779
        %v781 = vrot.slane %v780, 2
        %v782 = vadd.f32 %v780, %v781
        %v783 = vrot.slane %v782, 1
        %v784 = vadd.f32 %v782, %v783
        %v785 = vrot.slane %v767, 4
        %v786 = vadd.f32 %v767, %v785
        %v787 = vrot.slane %v786, 2
        %v788 = vadd.f32 %v786, %v787
        %v789 = vrot.slane %v788, 1
        %v790 = vadd.f32 %v788, %v789
        %v791 = vrot.slane %v768, 4
        %v792 = vadd.f32 %v768, %v791
        %v793 = vrot.slane %v792, 2
        %v794 = vadd.f32 %v792, %v793
        %v795 = vrot.slane %v794, 1
        %v796 = vadd.f32 %v794, %v795
        %v797 = vrot.slane %v769, 4
        %v798 = vadd.f32 %v769, %v797
        %v799 = vrot.slane %v798, 2
        %v800 = vadd.f32 %v798, %v799
        %v801 = vrot.slane %v800, 1
        %v802 = vadd.f32 %v800, %v801
        %v803 = vrot.slane %v770, 4
        %v804 = vadd.f32 %v770, %v803
        %v805 = vrot.slane %v804, 2
        %v806 = vadd.f32 %v804, %v805
        %v807 = vrot.slane %v806, 1
        %v808 = vadd.f32 %v806, %v807
        %v809 = vrot.slane %v771, 4
        %v810 = vadd.f32 %v771, %v809
        %v811 = vrot.slane %v810, 2
        %v812 = vadd.f32 %v810, %v811
        %v813 = vrot.slane %v812, 1
        %v814 = vadd.f32 %v812, %v813
        %v815 = vrot.slane %v772, 4
        %v816 = vadd.f32 %v772, %v815
        %v817 = vrot.slane %v816, 2
        %v818 = vadd.f32 %v816, %v817
        %v819 = vrot.slane %v818, 1
        %v820 = vadd.f32 %v818, %v819
        %v821 = vadd.f32 %v725, %v778
        %v822 = vadd.f32 %v726, %v784
        %v823 = vadd.f32 %v727, %v790
        %v824 = vadd.f32 %v728, %v796
        %v825 = vadd.f32 %v729, %v802
        %v826 = vadd.f32 %v730, %v808
        %v827 = vadd.f32 %v731, %v814
        %v828 = vadd.f32 %v732, %v820
        %vm837 = vcmask 1041409
        %v838 = vsel %vm837, %v822, %v821
        %vm839 = vcmask 1042434
        %v840 = vsel %vm839, %v823, %v838
        %vm841 = vcmask 1043459
        %v842 = vsel %vm841, %v824, %v840
        %vm843 = vcmask 1044484
        %v844 = vsel %vm843, %v825, %v842
        %vm845 = vcmask 1045509
        %v846 = vsel %vm845, %v826, %v844
        %vm847 = vcmask 1046534
        %v848 = vsel %vm847, %v827, %v846
        %vm849 = vcmask 1047559
        %v850 = vsel %vm849, %v828, %v848
        %852 = vst [vmem:[%s226] sm:$0xff] %v850
        %s853 = sand.u32 %s139, 1
        %s854 = scalar_lea.sflag [#allocation3], %s853
        %s855 = sand.u32 %s139, 1
        %s856 = smul.addr %s855, 8
        %s857 = scalar_lea.vmem [#allocation2], %s856
        // Predicated region
        $region37: #{tpu_custom_call.1} parent=35 // pred_check
          %p858 = pneg %p149
        $region38: #{tpu_custom_call.1} parent=35 // pred_check_branch
          %860 = sbr.rel (%p858) target = $region40
        $region39: #{tpu_custom_call.1} parent=35 // pred_region
          %s862 = ssub.s32 128, 128
          %863 = vsyncadd %s854, %s862
          %s864 = smul.addr %s22, 2
          %s865 = sadd.s32 %s23, %s864
          %s866 = smul.addr %s865, 128
          %s867 = scalar_lea.hbm %s4, %s866
          %s869 = sshll.u32 %s857, 4
          %s870 = int_to_ptr.vmem [resolvable:$true] %s869
          %872 = dma.vmem_to_hbm [thread:$0]  %s870, 128, %s867, %s854
        $region40: #{tpu_custom_call.1} parent=35 // pred_fallthru
          _
      $region36: #{tpu_custom_call.1} parent=5 // pred_fallthru
        _
      %p873 = scmp.le.s32.totalorder 2, %s13
      // Predicated region
      $region41: #{tpu_custom_call.1} parent=5 // pred_check
        %p874 = pneg %p873
      $region42: #{tpu_custom_call.1} parent=5 // pred_check_branch
        %876 = sbr.rel (%p874) target = $region44
      $region43: #{tpu_custom_call.1} parent=5 // pred_region
        %s877 = ssub.s32 %s13, 2
        // Predicated region
        $region45: #{tpu_custom_call.1} parent=43 // pred_check
          %p878 = pneg %p155
        $region46: #{tpu_custom_call.1} parent=43 // pred_check_branch
          %880 = sbr.rel (%p878) target = $region48
        $region47: #{tpu_custom_call.1} parent=43 // pred_region
          %s881 = sand.u32 %s140, 1
          %s882 = scalar_lea.sflag [#allocation3], %s881
          %s883 = sand.u32 %s140, 1
          %s884 = smul.addr %s883, 8
          %s885 = scalar_lea.vmem [#allocation2], %s884
          %886 = dma.done %s882, 128
        $region48: #{tpu_custom_call.1} parent=43 // pred_fallthru
          _
      $region44: #{tpu_custom_call.1} parent=5 // pred_fallthru
        _
    $region6: #{tpu_custom_call.1} parent=1 // loop_footer
      %s17 = sadd.s32 1, %s13
    $region7: #{tpu_custom_call.1} parent=1 // loop_footer_branch
      %12 = sbr.rel target = $region3
    $region8: #{tpu_custom_call.1} parent=1 // loop_exit
      _
    %887 = vsyncpa [#allocation3], 1
    %s888 = scalar_lea.sflag [#allocation3], 1
    %889 = vsyncpa %s888, 1

</llo_original>
